<compile_context>
chip_gen: v7x
topology: tpu7x:2x2x1
jax: 0.10.0
libtpu: 0.0.40
codegen_flags: <defaults>
</compile_context>

<pallas_src>
import functools
import math

import jax
import jax.numpy as jnp
from jax import lax
from jax.experimental import pallas as pl
from jax.experimental.pallas import tpu as pltpu  # noqa: F401  (imported per spec)


def _admm_qp_kernel(cg_ref, c_ref, m2_ref, m1_ref, h_ref, z_ref, *, iters, unroll):
    """Consolidated ADMM for  min 0.5 q z^T z + p^T z  s.t. G z <= h  (batched).

    cg_ref : (B, m)    CG = (-p @ K) @ G^T
    c_ref  : (B, nx)   C  = -p @ K
    m2_ref : (m, m)    M2 = rho * G @ K @ G^T
    m1_ref : (m, nx)   M1 = rho * G @ K
    h_ref  : (1, m)    inequality rhs (broadcast over batch)
    z_ref  : (B, nx)   output primal solution
    """
    CG = cg_ref[...]
    C = c_ref[...]
    M2 = m2_ref[...]
    M1 = m1_ref[...]
    h = h_ref[...]

    B, m = CG.shape

    def step(carry):
        S, U = carry
        D = S - U
        # v = G z  computed directly:  V = CG + D @ M2   (single MXU matmul)
        V = CG + jnp.dot(D, M2, preferred_element_type=jnp.float32)
        W = V + U
        S_new = jnp.minimum(h, W)       # s-update (projection onto {s <= h})
        U_new = W - S_new               # scaled dual update
        return (S_new, U_new)

    def body(_, carry):
        # Manual unroll: amortizes scalar loop overhead and lets the scheduler
        # interleave the next MXU push with the previous VPU epilogue.
        for _u in range(unroll):
            carry = step(carry)
        return carry

    carry = (jnp.zeros((B, m), jnp.float32), jnp.zeros((B, m), jnp.float32))
    n_major = iters // unroll
    carry = lax.fori_loop(0, n_major, body, carry)
    for _r in range(iters - n_major * unroll):   # static remainder (usually 0)
        carry = step(carry)
    S, U = carry

    # Reconstruct the primal solution once:  z = C + (s - u) @ M1
    z_ref[...] = C + jnp.dot(S - U, M1, preferred_element_type=jnp.float32)


def optnet_ineq_forward(puzzles, G2, z2, s2, *, Qpenalty=0.1, rho=1.0,
                        iters=2000, unroll=8):
    """Pallas implementation of OptNetIneq.forward."""
    B = puzzles.shape[0]
    nx = int(math.prod(puzzles.shape[1:]))
    hi = lax.Precision.HIGHEST  # keep host-side operator formation in full f32

    P = -puzzles.reshape(B, nx).astype(jnp.float32)            # p = -puzzles.view(B, -1)

    G1 = -jnp.eye(nx, dtype=jnp.float32)
    h1 = jnp.zeros((nx,), jnp.float32)
    G2f = G2.astype(jnp.float32)
    h2 = jnp.dot(G2f, z2.astype(jnp.float32), precision=hi) + s2.astype(jnp.float32)
    G = jnp.concatenate([G1, G2f], axis=0)                     # (m, nx)
    h = jnp.concatenate([h1, h2], axis=0)[None, :]             # (1, m)
    m = G.shape[0]

    Q = Qpenalty * jnp.eye(nx, dtype=jnp.float32)
    K = jnp.linalg.inv(Q + rho * jnp.dot(G.T, G, precision=hi)).astype(jnp.float32)

    # Batch-independent consolidated operators (hoists -p negation, rho scaling,
    # and 2 of the 3 per-iteration matmuls out of the kernel entirely).
    C = jnp.dot(-P, K, precision=hi)                           # (B, nx)
    M1 = rho * jnp.dot(G, K, precision=hi)                     # (m, nx)
    CG = jnp.dot(C, G.T, precision=hi)                         # (B, m)
    M2 = jnp.dot(M1, G.T, precision=hi)                        # (m, m)

    kernel = functools.partial(_admm_qp_kernel, iters=int(iters), unroll=int(unroll))

    # Total working set < 200 KiB -> single VMEM-resident block, grid=(1,).
    z = pl.pallas_call(
        kernel,
        out_shape=jax.ShapeDtypeStruct((B, nx), jnp.float32),
        grid=(1,),
        in_specs=[
            pl.BlockSpec((B, m), lambda i: (0, 0)),
            pl.BlockSpec((B, nx), lambda i: (0, 0)),
            pl.BlockSpec((m, m), lambda i: (0, 0)),
            pl.BlockSpec((m, nx), lambda i: (0, 0)),
            pl.BlockSpec((1, m), lambda i: (0, 0)),
        ],
        out_specs=pl.BlockSpec((B, nx), lambda i: (0, 0)),
    )(CG, C, M2, M1, h)

    # .float().view_as(puzzles)
    return z.reshape(puzzles.shape).astype(jnp.float32)


if __name__ == "__main__":
    # Module construction: OptNetIneq(n=2, Qpenalty=0.1, nineq=...) -> nx = (2**2)**3 = 64
    n = 2
    n2 = n * n
    nx = n2 ** 3                       # 64
    Qpenalty = 0.1

    key = jax.random.PRNGKey(0)
    k_a, k_g2, k_x = jax.random.split(key, 3)

    # Deterministic parameter init (shapes from __init__); A is unused in forward.
    A = jax.random.uniform(k_a, (50, nx), dtype=jnp.float32)                    # noqa: F841
    G2 = jax.random.uniform(k_g2, (128, nx), minval=-1.0, maxval=1.0,
                            dtype=jnp.float32)
    z2 = jnp.zeros((nx,), jnp.float32)
    s2 = jnp.ones((128,), jnp.float32)

    # Input "puzzles": (batch, n^2, n^2, n^2) = (2, 4, 4, 4)
    puzzles = jax.random.uniform(k_x, (2, n2, n2, n2), dtype=jnp.float32)

    out = optnet_ineq_forward(puzzles, G2, z2, s2, Qpenalty=Qpenalty,
                              rho=1.0, iters=2000, unroll=8)
    out = jax.block_until_ready(out)

    assert out.shape == puzzles.shape and out.dtype == jnp.float32
    assert bool(jnp.all(jnp.isfinite(out)))
    print("KERNEL_OK")
</pallas_src>

<mosaic_0001>
module attributes {stable_mosaic.version = 11 : i64} {
  func.func @_admm_qp_kernel(%arg0: i32, %arg1: memref<2x192xf32, #tpu.memory_space<vmem>>, %arg2: memref<2x64xf32, #tpu.memory_space<vmem>>, %arg3: memref<192x192xf32, #tpu.memory_space<vmem>>, %arg4: memref<192x64xf32, #tpu.memory_space<vmem>>, %arg5: memref<1x192xf32, #tpu.memory_space<vmem>>, %arg6: memref<2x64xf32, #tpu.memory_space<vmem>>) attributes {dimension_semantics = [#tpu.dimension_semantics<arbitrary>], iteration_bounds = array<i64: 1>, scalar_prefetch = 0 : i64, scratch_operands = 0 : i64, tpu.core_type = #tpu.core_type<tc>, window_params = [{pipeline_mode = #tpu.pipeline_mode<synchronous>, transform_indices = @transform_0, window_bounds = array<i64: 2, 192>}, {pipeline_mode = #tpu.pipeline_mode<synchronous>, transform_indices = @transform_1, window_bounds = array<i64: 2, 64>}, {pipeline_mode = #tpu.pipeline_mode<synchronous>, transform_indices = @transform_2, window_bounds = array<i64: 192, 192>}, {pipeline_mode = #tpu.pipeline_mode<synchronous>, transform_indices = @transform_3, window_bounds = array<i64: 192, 64>}, {pipeline_mode = #tpu.pipeline_mode<synchronous>, transform_indices = @transform_4, window_bounds = array<i64: 1, 192>}, {pipeline_mode = #tpu.pipeline_mode<synchronous>, transform_indices = @transform_5, window_bounds = array<i64: 2, 64>}]} {
    %c0 = arith.constant 0 : index
    %c0_0 = arith.constant 0 : index
    %0 = vector.load %arg1[%c0, %c0_0] : memref<2x192xf32, #tpu.memory_space<vmem>>, vector<2x192xf32>
    %c0_1 = arith.constant 0 : index
    %c0_2 = arith.constant 0 : index
    %1 = vector.load %arg2[%c0_1, %c0_2] : memref<2x64xf32, #tpu.memory_space<vmem>>, vector<2x64xf32>
    %c0_3 = arith.constant 0 : index
    %c0_4 = arith.constant 0 : index
    %2 = vector.load %arg3[%c0_3, %c0_4] : memref<192x192xf32, #tpu.memory_space<vmem>>, vector<192x192xf32>
    %c0_5 = arith.constant 0 : index
    %c0_6 = arith.constant 0 : index
    %3 = vector.load %arg4[%c0_5, %c0_6] : memref<192x64xf32, #tpu.memory_space<vmem>>, vector<192x64xf32>
    %c0_7 = arith.constant 0 : index
    %c0_8 = arith.constant 0 : index
    %4 = vector.load %arg5[%c0_7, %c0_8] : memref<1x192xf32, #tpu.memory_space<vmem>>, vector<1x192xf32>
    %cst = arith.constant 0.000000e+00 : f32
    %5 = vector.broadcast %cst : f32 to vector<2x192xf32>
    %cst_9 = arith.constant 0.000000e+00 : f32
    %6 = vector.broadcast %cst_9 : f32 to vector<2x192xf32>
    %c0_i32 = arith.constant 0 : i32
    %c250_i32 = arith.constant 250 : i32
    %7 = arith.addi %c0_i32, %c250_i32 : i32
    %c1_i32 = arith.constant 1 : i32
    %8:2 = scf.for %arg7 = %c0_i32 to %7 step %c1_i32 iter_args(%arg8 = %5, %arg9 = %6) -> (vector<2x192xf32>, vector<2x192xf32>)  : i32 {
      %13 = arith.subf %arg8, %arg9 : vector<2x192xf32>
      %cst_13 = arith.constant dense<0.000000e+00> : vector<2x192xf32>
      %14 = tpu.matmul %13, %2, %cst_13 {dimension_numbers = #tpu.dot_dimension_numbers<[1], [0], [0], [1], [0, 0, 1, 1], [], []>} : vector<2x192xf32>, vector<192x192xf32>, vector<2x192xf32> -> vector<2x192xf32>
      %15 = arith.addf %0, %14 : vector<2x192xf32>
      %16 = arith.addf %15, %arg9 : vector<2x192xf32>
      %17 = vector.broadcast %4 : vector<1x192xf32> to vector<2x192xf32>
      %18 = arith.minimumf %17, %16 : vector<2x192xf32>
      %19 = arith.subf %16, %18 : vector<2x192xf32>
      %20 = arith.subf %18, %19 : vector<2x192xf32>
      %cst_14 = arith.constant dense<0.000000e+00> : vector<2x192xf32>
      %21 = tpu.matmul %20, %2, %cst_14 {dimension_numbers = #tpu.dot_dimension_numbers<[1], [0], [0], [1], [0, 0, 1, 1], [], []>} : vector<2x192xf32>, vector<192x192xf32>, vector<2x192xf32> -> vector<2x192xf32>
      %22 = arith.addf %0, %21 : vector<2x192xf32>
      %23 = arith.addf %22, %19 : vector<2x192xf32>
      %24 = vector.broadcast %4 : vector<1x192xf32> to vector<2x192xf32>
      %25 = arith.minimumf %24, %23 : vector<2x192xf32>
      %26 = arith.subf %23, %25 : vector<2x192xf32>
      %27 = arith.subf %25, %26 : vector<2x192xf32>
      %cst_15 = arith.constant dense<0.000000e+00> : vector<2x192xf32>
      %28 = tpu.matmul %27, %2, %cst_15 {dimension_numbers = #tpu.dot_dimension_numbers<[1], [0], [0], [1], [0, 0, 1, 1], [], []>} : vector<2x192xf32>, vector<192x192xf32>, vector<2x192xf32> -> vector<2x192xf32>
      %29 = arith.addf %0, %28 : vector<2x192xf32>
      %30 = arith.addf %29, %26 : vector<2x192xf32>
      %31 = vector.broadcast %4 : vector<1x192xf32> to vector<2x192xf32>
      %32 = arith.minimumf %31, %30 : vector<2x192xf32>
      %33 = arith.subf %30, %32 : vector<2x192xf32>
      %34 = arith.subf %32, %33 : vector<2x192xf32>
      %cst_16 = arith.constant dense<0.000000e+00> : vector<2x192xf32>
      %35 = tpu.matmul %34, %2, %cst_16 {dimension_numbers = #tpu.dot_dimension_numbers<[1], [0], [0], [1], [0, 0, 1, 1], [], []>} : vector<2x192xf32>, vector<192x192xf32>, vector<2x192xf32> -> vector<2x192xf32>
      %36 = arith.addf %0, %35 : vector<2x192xf32>
      %37 = arith.addf %36, %33 : vector<2x192xf32>
      %38 = vector.broadcast %4 : vector<1x192xf32> to vector<2x192xf32>
      %39 = arith.minimumf %38, %37 : vector<2x192xf32>
      %40 = arith.subf %37, %39 : vector<2x192xf32>
      %41 = arith.subf %39, %40 : vector<2x192xf32>
      %cst_17 = arith.constant dense<0.000000e+00> : vector<2x192xf32>
      %42 = tpu.matmul %41, %2, %cst_17 {dimension_numbers = #tpu.dot_dimension_numbers<[1], [0], [0], [1], [0, 0, 1, 1], [], []>} : vector<2x192xf32>, vector<192x192xf32>, vector<2x192xf32> -> vector<2x192xf32>
      %43 = arith.addf %0, %42 : vector<2x192xf32>
      %44 = arith.addf %43, %40 : vector<2x192xf32>
      %45 = vector.broadcast %4 : vector<1x192xf32> to vector<2x192xf32>
      %46 = arith.minimumf %45, %44 : vector<2x192xf32>
      %47 = arith.subf %44, %46 : vector<2x192xf32>
      %48 = arith.subf %46, %47 : vector<2x192xf32>
      %cst_18 = arith.constant dense<0.000000e+00> : vector<2x192xf32>
      %49 = tpu.matmul %48, %2, %cst_18 {dimension_numbers = #tpu.dot_dimension_numbers<[1], [0], [0], [1], [0, 0, 1, 1], [], []>} : vector<2x192xf32>, vector<192x192xf32>, vector<2x192xf32> -> vector<2x192xf32>
      %50 = arith.addf %0, %49 : vector<2x192xf32>
      %51 = arith.addf %50, %47 : vector<2x192xf32>
      %52 = vector.broadcast %4 : vector<1x192xf32> to vector<2x192xf32>
      %53 = arith.minimumf %52, %51 : vector<2x192xf32>
      %54 = arith.subf %51, %53 : vector<2x192xf32>
      %55 = arith.subf %53, %54 : vector<2x192xf32>
      %cst_19 = arith.constant dense<0.000000e+00> : vector<2x192xf32>
      %56 = tpu.matmul %55, %2, %cst_19 {dimension_numbers = #tpu.dot_dimension_numbers<[1], [0], [0], [1], [0, 0, 1, 1], [], []>} : vector<2x192xf32>, vector<192x192xf32>, vector<2x192xf32> -> vector<2x192xf32>
      %57 = arith.addf %0, %56 : vector<2x192xf32>
      %58 = arith.addf %57, %54 : vector<2x192xf32>
      %59 = vector.broadcast %4 : vector<1x192xf32> to vector<2x192xf32>
      %60 = arith.minimumf %59, %58 : vector<2x192xf32>
      %61 = arith.subf %58, %60 : vector<2x192xf32>
      %62 = arith.subf %60, %61 : vector<2x192xf32>
      %cst_20 = arith.constant dense<0.000000e+00> : vector<2x192xf32>
      %63 = tpu.matmul %62, %2, %cst_20 {dimension_numbers = #tpu.dot_dimension_numbers<[1], [0], [0], [1], [0, 0, 1, 1], [], []>} : vector<2x192xf32>, vector<192x192xf32>, vector<2x192xf32> -> vector<2x192xf32>
      %64 = arith.addf %0, %63 : vector<2x192xf32>
      %65 = arith.addf %64, %61 : vector<2x192xf32>
      %66 = vector.broadcast %4 : vector<1x192xf32> to vector<2x192xf32>
      %67 = arith.minimumf %66, %65 : vector<2x192xf32>
      %68 = arith.subf %65, %67 : vector<2x192xf32>
      scf.yield %67, %68 : vector<2x192xf32>, vector<2x192xf32>
    }
    %9 = arith.subf %8#0, %8#1 : vector<2x192xf32>
    %cst_10 = arith.constant dense<0.000000e+00> : vector<2x64xf32>
    %10 = tpu.matmul %9, %3, %cst_10 {dimension_numbers = #tpu.dot_dimension_numbers<[1], [0], [0], [1], [0, 0, 1, 1], [], []>} : vector<2x192xf32>, vector<192x64xf32>, vector<2x64xf32> -> vector<2x64xf32>
    %11 = arith.addf %1, %10 : vector<2x64xf32>
    %c0_11 = arith.constant 0 : index
    %c0_12 = arith.constant 0 : index
    %12 = vector.load %arg6[%c0_11, %c0_12] : memref<2x64xf32, #tpu.memory_space<vmem>>, vector<2x64xf32>
    tpu.vector_store %arg6[%c0_11, %c0_12], %11 {strides = array<i32>} : memref<2x64xf32, #tpu.memory_space<vmem>>, vector<2x64xf32>,
    return
  }
  func.func @transform_0(%arg0: i32) -> (i32, i32) {
    %c0_i32 = arith.constant 0 : i32
    %c0_i32_0 = arith.constant 0 : i32
    %c0_i32_1 = arith.constant 0 : i32
    return %c0_i32, %c0_i32_0 : i32, i32
  }
  func.func @transform_1(%arg0: i32) -> (i32, i32) {
    %c0_i32 = arith.constant 0 : i32
    %c0_i32_0 = arith.constant 0 : i32
    %c0_i32_1 = arith.constant 0 : i32
    return %c0_i32, %c0_i32_0 : i32, i32
  }
  func.func @transform_2(%arg0: i32) -> (i32, i32) {
    %c0_i32 = arith.constant 0 : i32
    %c0_i32_0 = arith.constant 0 : i32
    %c0_i32_1 = arith.constant 0 : i32
    return %c0_i32, %c0_i32_0 : i32, i32
  }
  func.func @transform_3(%arg0: i32) -> (i32, i32) {
    %c0_i32 = arith.constant 0 : i32
    %c0_i32_0 = arith.constant 0 : i32
    %c0_i32_1 = arith.constant 0 : i32
    return %c0_i32, %c0_i32_0 : i32, i32
  }
  func.func @transform_4(%arg0: i32) -> (i32, i32) {
    %c0_i32 = arith.constant 0 : i32
    %c0_i32_0 = arith.constant 0 : i32
    %c0_i32_1 = arith.constant 0 : i32
    return %c0_i32, %c0_i32_0 : i32, i32
  }
  func.func @transform_5(%arg0: i32) -> (i32, i32) {
    %c0_i32 = arith.constant 0 : i32
    %c0_i32_0 = arith.constant 0 : i32
    %c0_i32_1 = arith.constant 0 : i32
    return %c0_i32, %c0_i32_0 : i32, i32
  }
}

</mosaic_0001>

<llo_original>
// kernel: tpu_custom_call.1
$region0: #{tpu_custom_call.1}
  #allocation0 [shape = 'u32[]', space=smem, size = 0x4, offset = 0x4, fixed_abs, tag = 'smem constant byte address 0x4 - core index']
  #allocation1 [shape = 'u32[144,128]{1,0:T(1,128)}', space=vmem, size = 0x12000, scoped, tag = 'internal scratch']
  %s0 = inlined_call_operand.vmem [shape: f32[2,192], index: 0, kind: input, shape index: {}]
  %s1 = inlined_call_operand.vmem [shape: f32[2,64], index: 1, kind: input, shape index: {}]
  %s2 = inlined_call_operand.hbm [shape: f32[192,192], index: 2, kind: input, shape index: {}]
  %s3 = inlined_call_operand.vmem [shape: f32[192,64], index: 3, kind: input, shape index: {}]
  %s4 = inlined_call_operand.vmem [shape: f32[1,192], index: 4, kind: input, shape index: {}]
  %s5 = inlined_call_operand.hbm [shape: f32[2,64], index: 5, kind: output, shape index: {}]
  %s6 = sld [smem:[#allocation0]]
  $region41: #{tpu_custom_call.1} parent=0
    _
  %s8 = ssub.s32 1, %s6
  %s9 = scalar_select 0, %s8, %s6
  $region1: #{tpu_custom_call.1} parent=0
    #allocation2 [shape = 'u8[196608]{0}', space=vmem, size = 0x30000, scoped, tag = 'input window, operand 2, single buffered']
    #allocation3 [shape = 's32[1]{0}', space=sflag, size = 0x4, scoped, tag = 'scoped memory for tpu_custom_call.1']
    #allocation4 [shape = 's32[1]{0}', space=sflag, size = 0x4, scoped, tag = 'scoped memory for tpu_custom_call.1']
    #allocation5 [shape = 'u8[1024]{0}', space=vmem, size = 0x400, scoped, tag = 'output window, operand 0, single buffered']
    %10 = vsyncpa [#allocation3], 0
    %11 = vsyncpa [#allocation4], 0
    // Predicated region
    $region2: #{tpu_custom_call.1} parent=1 // pred_check
      _
    $region3: #{tpu_custom_call.1} parent=1 // pred_check_branch
      %13 = sbr.rel (0) target = $region5
    $region4: #{tpu_custom_call.1} parent=1 // pred_region
      _
    $region5: #{tpu_custom_call.1} parent=1 // pred_fallthru
      _
    // Predicated region
    $region6: #{tpu_custom_call.1} parent=1 // pred_check
      _
    $region7: #{tpu_custom_call.1} parent=1 // pred_check_branch
      %15 = sbr.rel (0) target = $region9
    $region8: #{tpu_custom_call.1} parent=1 // pred_region
      _
    $region9: #{tpu_custom_call.1} parent=1 // pred_fallthru
      _
    // Predicated region
    $region10: #{tpu_custom_call.1} parent=1 // pred_check
      _
    $region11: #{tpu_custom_call.1} parent=1 // pred_check_branch
      %17 = sbr.rel (0) target = $region13
    $region12: #{tpu_custom_call.1} parent=1 // pred_region
      %s19 = ssub.s32 6144, 6144
      %20 = vsyncadd [#allocation3], %s19
      %s21 = sshll.u32 [#allocation2], 4
      %s22 = int_to_ptr.vmem [resolvable:$true] %s21
      %27 = dma.hbm_to_vmem [thread:$0]  %s2, 6144, %s22, [#allocation3], 256, 256, 16
    $region13: #{tpu_custom_call.1} parent=1 // pred_fallthru
      _
    // Predicated region
    $region14: #{tpu_custom_call.1} parent=1 // pred_check
      _
    $region15: #{tpu_custom_call.1} parent=1 // pred_check_branch
      %29 = sbr.rel (0) target = $region17
    $region16: #{tpu_custom_call.1} parent=1 // pred_region
      _
    $region17: #{tpu_custom_call.1} parent=1 // pred_fallthru
      _
    // Predicated region
    $region18: #{tpu_custom_call.1} parent=1 // pred_check
      _
    $region19: #{tpu_custom_call.1} parent=1 // pred_check_branch
      %31 = sbr.rel (0) target = $region21
    $region20: #{tpu_custom_call.1} parent=1 // pred_region
      _
    $region21: #{tpu_custom_call.1} parent=1 // pred_fallthru
      _
    // Predicated region
    $region22: #{tpu_custom_call.1} parent=1 // pred_check
      _
    $region23: #{tpu_custom_call.1} parent=1 // pred_check_branch
      %33 = sbr.rel (0) target = $region25
    $region24: #{tpu_custom_call.1} parent=1 // pred_region
      %34 = dma.done [#allocation3], 6144
    $region25: #{tpu_custom_call.1} parent=1 // pred_fallthru
      _
    %v35 = vld [vmem:[%s0] sm:$0xf]
    %v36 = vld [vmem:[%s1] sm:$0x3]
    %v37 = vld [vmem:[#allocation2] sm:$0xff]
    %v38 = vld [vmem:[#allocation2 + $0x8] sm:$0xff]
    %v39 = vld [vmem:[#allocation2 + $0x10] sm:$0xff]
    %v40 = vld [vmem:[#allocation2 + $0x18] sm:$0xff]
    %v41 = vld [vmem:[#allocation2 + $0x20] sm:$0xff]
    %v42 = vld [vmem:[#allocation2 + $0x28] sm:$0xff]
    %v43 = vld [vmem:[#allocation2 + $0x30] sm:$0xff]
    %v44 = vld [vmem:[#allocation2 + $0x38] sm:$0xff]
    %v45 = vld [vmem:[#allocation2 + $0x40] sm:$0xff]
    %v46 = vld [vmem:[#allocation2 + $0x48] sm:$0xff]
    %v47 = vld [vmem:[#allocation2 + $0x50] sm:$0xff]
    %v48 = vld [vmem:[#allocation2 + $0x58] sm:$0xff]
    %v49 = vld [vmem:[#allocation2 + $0x60] sm:$0xff]
    %v50 = vld [vmem:[#allocation2 + $0x68] sm:$0xff]
    %v51 = vld [vmem:[#allocation2 + $0x70] sm:$0xff]
    %v52 = vld [vmem:[#allocation2 + $0x78] sm:$0xff]
    %v53 = vld [vmem:[#allocation2 + $0x80] sm:$0xff]
    %v54 = vld [vmem:[#allocation2 + $0x88] sm:$0xff]
    %v55 = vld [vmem:[#allocation2 + $0x90] sm:$0xff]
    %v56 = vld [vmem:[#allocation2 + $0x98] sm:$0xff]
    %v57 = vld [vmem:[#allocation2 + $0xa0] sm:$0xff]
    %v58 = vld [vmem:[#allocation2 + $0xa8] sm:$0xff]
    %v59 = vld [vmem:[#allocation2 + $0xb0] sm:$0xff]
    %v60 = vld [vmem:[#allocation2 + $0xb8] sm:$0xff]
    %v61 = vld [vmem:[#allocation2 + $0xc0] sm:$0xff]
    %v62 = vld [vmem:[#allocation2 + $0xc8] sm:$0xff]
    %v63 = vld [vmem:[#allocation2 + $0xd0] sm:$0xff]
    %v64 = vld [vmem:[#allocation2 + $0xd8] sm:$0xff]
    %v65 = vld [vmem:[#allocation2 + $0xe0] sm:$0xff]
    %v66 = vld [vmem:[#allocation2 + $0xe8] sm:$0xff]
    %v67 = vld [vmem:[#allocation2 + $0xf0] sm:$0xff]
    %v68 = vld [vmem:[#allocation2 + $0xf8] sm:$0xff]
    %v69 = vld [vmem:[#allocation2 + $0x100] sm:$0xff]
    %v70 = vld [vmem:[#allocation2 + $0x108] sm:$0xff]
    %v71 = vld [vmem:[#allocation2 + $0x110] sm:$0xff]
    %v72 = vld [vmem:[#allocation2 + $0x118] sm:$0xff]
    %v73 = vld [vmem:[#allocation2 + $0x120] sm:$0xff]
    %v74 = vld [vmem:[#allocation2 + $0x128] sm:$0xff]
    %v75 = vld [vmem:[#allocation2 + $0x130] sm:$0xff]
    %v76 = vld [vmem:[#allocation2 + $0x138] sm:$0xff]
    %v77 = vld [vmem:[#allocation2 + $0x140] sm:$0xff]
    %v78 = vld [vmem:[#allocation2 + $0x148] sm:$0xff]
    %v79 = vld [vmem:[#allocation2 + $0x150] sm:$0xff]
    %v80 = vld [vmem:[#allocation2 + $0x158] sm:$0xff]
    %v81 = vld [vmem:[#allocation2 + $0x160] sm:$0xff]
    %v82 = vld [vmem:[#allocation2 + $0x168] sm:$0xff]
    %v83 = vld [vmem:[#allocation2 + $0x170] sm:$0xff]
    %v84 = vld [vmem:[#allocation2 + $0x178] sm:$0xff]
    %v85 = vld [vmem:[%s3] sm:$0xff]
    %v86 = vld [vmem:[%s3 + $0x8] sm:$0xff]
    %v87 = vld [vmem:[%s3 + $0x10] sm:$0xff]
    %v88 = vld [vmem:[%s3 + $0x18] sm:$0xff]
    %v89 = vld [vmem:[%s3 + $0x20] sm:$0xff]
    %v90 = vld [vmem:[%s3 + $0x28] sm:$0xff]
    %v91 = vld [vmem:[%s3 + $0x30] sm:$0xff]
    %v92 = vld [vmem:[%s3 + $0x38] sm:$0xff]
    %v93 = vld [vmem:[%s3 + $0x40] sm:$0xff]
    %v94 = vld [vmem:[%s3 + $0x48] sm:$0xff]
    %v95 = vld [vmem:[%s3 + $0x50] sm:$0xff]
    %v96 = vld [vmem:[%s3 + $0x58] sm:$0xff]
    %v97 = vld [vmem:[%s3 + $0x60] sm:$0xff]
    %v98 = vld [vmem:[%s3 + $0x68] sm:$0xff]
    %v99 = vld [vmem:[%s3 + $0x70] sm:$0xff]
    %v100 = vld [vmem:[%s3 + $0x78] sm:$0xff]
    %v101 = vld [vmem:[%s3 + $0x80] sm:$0xff]
    %v102 = vld [vmem:[%s3 + $0x88] sm:$0xff]
    %v103 = vld [vmem:[%s3 + $0x90] sm:$0xff]
    %v104 = vld [vmem:[%s3 + $0x98] sm:$0xff]
    %v105 = vld [vmem:[%s3 + $0xa0] sm:$0xff]
    %v106 = vld [vmem:[%s3 + $0xa8] sm:$0xff]
    %v107 = vld [vmem:[%s3 + $0xb0] sm:$0xff]
    %v108 = vld [vmem:[%s3 + $0xb8] sm:$0xff]
    %v109 = vld [vmem:[%s4] sm:$0x3]
    loop: start=0, step=1, limit=250
    $region26: #{tpu_custom_call.1} parent=1 // loop_pre_header
      _
    $region27: #{tpu_custom_call.1} parent=1 // loop_header
      %s111 = sphi 0, %s115
      %p112 = scmp.ge.s32.totalorder %s111, 250
      %v116 = vphi 0.0, %v1117
      %v117 = vphi 0.0, %v1118
      %v118 = vphi 0.0, %v1130
    $region28: #{tpu_custom_call.1} parent=1 // loop_header_branch
      %114 = sbr.rel (%p112) target = $region32
    $region29: #{tpu_custom_call.1} parent=1 // loop_body
      %v121 = vunpack.c.l.s4 1983009808
      %v122 = vunpack.c.0.s8 %v121
      %v123 = vlaneseq
      %v124 = vshrl.u32 %v123, 7
      %v125 = vsub.s32 %v122, %v124
      %v126 = vrot.slane %v118, %v125
      %v127 = vcombine.high %v126, %v126
      %v130 = vsub.f32 %v116, %v126
      %v131 = vsub.f32 %v117, %v127
      %vm132 = vcmask 523264
      %v134 = vsel %vm132, %v131, 0
      %136 = vmatprep.subr.mxu0 %v38
      %137 = vmatpush1.msra.mxu0 %v37
      %138 = vmatprep.subr.mxu0 %v40
      %139 = vmatpush1.msra.mxu0 %v39
      %140 = vmatprep.subr.mxu0 %v42
      %141 = vmatpush1.msra.mxu0 %v41
      %142 = vmatprep.subr.mxu0 %v44
      %143 = vmatpush1.msra.mxu0 %v43
      %144 = vmatprep.subr.mxu0 %v46
      %145 = vmatpush1.msra.mxu0 %v45
      %146 = vmatprep.subr.mxu0 %v48
      %147 = vmatpush1.msra.mxu0 %v47
      %148 = vmatprep.subr.mxu0 %v50
      %149 = vmatpush1.msra.mxu0 %v49
      %150 = vmatprep.subr.mxu0 %v52
      %151 = vmatpush1.msra.mxu0 %v51
      %152 = vmatprep.subr.mxu0 %v54
      %153 = vmatpush1.msra.mxu0 %v53
      %154 = vmatprep.subr.mxu0 %v56
      %155 = vmatpush1.msra.mxu0 %v55
      %156 = vmatprep.subr.mxu0 %v58
      %157 = vmatpush1.msra.mxu0 %v57
      %158 = vmatprep.subr.mxu0 %v60
      %159 = vmatpush1.msra.mxu0 %v59
      %160 = vmatprep.subr.mxu0 %v62
      %161 = vmatpush1.msra.mxu0 %v61
      %162 = vmatprep.subr.mxu0 %v64
      %163 = vmatpush1.msra.mxu0 %v63
      %164 = vmatprep.subr.mxu0 %v66
      %165 = vmatpush1.msra.mxu0 %v65
      %166 = vmatprep.subr.mxu0 %v68
      %167 = vmatpush1.msra.mxu0 %v67
      %168 = vmatprep.subr.mxu0 %v70
      %169 = vmatpush1.msra.mxu0 %v69
      %170 = vmatprep.subr.mxu0 %v72
      %171 = vmatpush1.msra.mxu0 %v71
      %172 = vmatprep.subr.mxu0 %v74
      %173 = vmatpush1.msra.mxu0 %v73
      %174 = vmatprep.subr.mxu0 %v76
      %175 = vmatpush1.msra.mxu0 %v75
      %176 = vmatprep.subr.mxu0 %v78
      %177 = vmatpush1.msra.mxu0 %v77
      %178 = vmatprep.subr.mxu0 %v80
      %179 = vmatpush1.msra.mxu0 %v79
      %180 = vmatprep.subr.mxu0 %v82
      %181 = vmatpush1.msra.mxu0 %v81
      %182 = vmatprep.subr.mxu0 %v84
      %183 = vmatpush1.msra.mxu0 %v83
      %184 = vmatprep.subr.mxu0 0.0
      %185 = vmatpush1.msra.mxu0 0.0
      %186 = vmatprep.subr.mxu0 0.0
      %187 = vmatpush1.msra.mxu0 0.0
      %188 = vmatprep.subr.mxu0 0.0
      %189 = vmatpush1.msra.mxu0 0.0
      %190 = vmatprep.subr.mxu0 0.0
      %191 = vmatpush1.msra.mxu0 0.0
      %192 = vmatprep.subr.mxu0 0.0
      %193 = vmatpush1.msra.mxu0 0.0
      %194 = vmatprep.subr.mxu0 0.0
      %195 = vmatpush1.msra.mxu0 0.0
      %196 = vmatprep.subr.mxu0 0.0
      %197 = vmatpush1.msra.mxu0 0.0
      %198 = vmatprep.subr.mxu0 0.0
      %199 = vmatpush1.msra.mxu0 0.0
      %200 = vmatprep.mubr.f32.mxu0 %v134
      %201 = vmatmul.mubr.f32.gmra.mrb[0].mxu0 %v130
      %v202 = vpop.f32.mrb[0].mxu0
      %v203 = vadd.f32 0.0, %v202
      %v204 = vpop.f32.mrb[0].mxu0
      %v205 = vadd.f32 0.0, %v204
      %206 = vdwg.mxu0
      %v209 = vcombine.low %v203, %v205
      %v211 = vunpack.c.l.s4 1983009808
      %v212 = vunpack.c.0.s8 %v211
      %v213 = vlaneseq
      %v214 = vshrl.u32 %v213, 7
      %v215 = vsub.s32 %v212, %v214
      %v216 = vrot.slane %v209, %v215
      %v218 = vadd.f32 %v35, %v216
      %v219 = vadd.f32 %v218, %v118
      %v221 = vlaneseq
      %v222 = vshrl.u32 %v221, 7
      %v223 = vsub.s32 0, %v222
      %v224 = vrot.slane %v109, %v223
      %v225 = vlaneseq
      %v226 = vshrl.u32 %v225, 7
      %v227 = vsub.s32 1, %v226
      %v228 = vrot.slane %v109, %v227
      %v233 = vunpack.c.l.s4 1983009808
      %v234 = vunpack.c.0.s8 %v233
      %v235 = vlaneseq
      %v236 = vshrl.u32 %v235, 7
      %v237 = vsub.s32 %v234, %v236
      %v238 = vrot.slane %v219, %v237
      %v239 = vcombine.high %v238, %v238
      %v242 = vmin.f32 %v224, %v238
      %v243 = vmin.f32 %v228, %v239
      %v246 = vcombine.low %v242, %v243
      %v248 = vunpack.c.l.s4 1983009808
      %v249 = vunpack.c.0.s8 %v248
      %v250 = vlaneseq
      %v251 = vshrl.u32 %v250, 7
      %v252 = vsub.s32 %v249, %v251
      %v253 = vrot.slane %v246, %v252
      %v255 = vsub.f32 %v219, %v253
      %v258 = vunpack.c.l.s4 1983009808
      %v259 = vunpack.c.0.s8 %v258
      %v260 = vlaneseq
      %v261 = vshrl.u32 %v260, 7
      %v262 = vsub.s32 %v259, %v261
      %v263 = vrot.slane %v255, %v262
      %v264 = vcombine.high %v263, %v263
      %v267 = vsub.f32 %v242, %v263
      %v268 = vsub.f32 %v243, %v264
      %v270 = vsel %vm132, %v268, 0
      %272 = vmatprep.subr.mxu0 %v38
      %273 = vmatpush1.msra.mxu0 %v37
      %274 = vmatprep.subr.mxu0 %v40
      %275 = vmatpush1.msra.mxu0 %v39
      %276 = vmatprep.subr.mxu0 %v42
      %277 = vmatpush1.msra.mxu0 %v41
      %278 = vmatprep.subr.mxu0 %v44
      %279 = vmatpush1.msra.mxu0 %v43
      %280 = vmatprep.subr.mxu0 %v46
      %281 = vmatpush1.msra.mxu0 %v45
      %282 = vmatprep.subr.mxu0 %v48
      %283 = vmatpush1.msra.mxu0 %v47
      %284 = vmatprep.subr.mxu0 %v50
      %285 = vmatpush1.msra.mxu0 %v49
      %286 = vmatprep.subr.mxu0 %v52
      %287 = vmatpush1.msra.mxu0 %v51
      %288 = vmatprep.subr.mxu0 %v54
      %289 = vmatpush1.msra.mxu0 %v53
      %290 = vmatprep.subr.mxu0 %v56
      %291 = vmatpush1.msra.mxu0 %v55
      %292 = vmatprep.subr.mxu0 %v58
      %293 = vmatpush1.msra.mxu0 %v57
      %294 = vmatprep.subr.mxu0 %v60
      %295 = vmatpush1.msra.mxu0 %v59
      %296 = vmatprep.subr.mxu0 %v62
      %297 = vmatpush1.msra.mxu0 %v61
      %298 = vmatprep.subr.mxu0 %v64
      %299 = vmatpush1.msra.mxu0 %v63
      %300 = vmatprep.subr.mxu0 %v66
      %301 = vmatpush1.msra.mxu0 %v65
      %302 = vmatprep.subr.mxu0 %v68
      %303 = vmatpush1.msra.mxu0 %v67
      %304 = vmatprep.subr.mxu0 %v70
      %305 = vmatpush1.msra.mxu0 %v69
      %306 = vmatprep.subr.mxu0 %v72
      %307 = vmatpush1.msra.mxu0 %v71
      %308 = vmatprep.subr.mxu0 %v74
      %309 = vmatpush1.msra.mxu0 %v73
      %310 = vmatprep.subr.mxu0 %v76
      %311 = vmatpush1.msra.mxu0 %v75
      %312 = vmatprep.subr.mxu0 %v78
      %313 = vmatpush1.msra.mxu0 %v77
      %314 = vmatprep.subr.mxu0 %v80
      %315 = vmatpush1.msra.mxu0 %v79
      %316 = vmatprep.subr.mxu0 %v82
      %317 = vmatpush1.msra.mxu0 %v81
      %318 = vmatprep.subr.mxu0 %v84
      %319 = vmatpush1.msra.mxu0 %v83
      %320 = vmatprep.subr.mxu0 0.0
      %321 = vmatpush1.msra.mxu0 0.0
      %322 = vmatprep.subr.mxu0 0.0
      %323 = vmatpush1.msra.mxu0 0.0
      %324 = vmatprep.subr.mxu0 0.0
      %325 = vmatpush1.msra.mxu0 0.0
      %326 = vmatprep.subr.mxu0 0.0
      %327 = vmatpush1.msra.mxu0 0.0
      %328 = vmatprep.subr.mxu0 0.0
      %329 = vmatpush1.msra.mxu0 0.0
      %330 = vmatprep.subr.mxu0 0.0
      %331 = vmatpush1.msra.mxu0 0.0
      %332 = vmatprep.subr.mxu0 0.0
      %333 = vmatpush1.msra.mxu0 0.0
      %334 = vmatprep.subr.mxu0 0.0
      %335 = vmatpush1.msra.mxu0 0.0
      %336 = vmatprep.mubr.f32.mxu0 %v270
      %337 = vmatmul.mubr.f32.gmra.mrb[0].mxu0 %v267
      %v338 = vpop.f32.mrb[0].mxu0
      %v339 = vadd.f32 0.0, %v338
      %v340 = vpop.f32.mrb[0].mxu0
      %v341 = vadd.f32 0.0, %v340
      %342 = vdwg.mxu0
      %v345 = vcombine.low %v339, %v341
      %v347 = vunpack.c.l.s4 1983009808
      %v348 = vunpack.c.0.s8 %v347
      %v349 = vlaneseq
      %v350 = vshrl.u32 %v349, 7
      %v351 = vsub.s32 %v348, %v350
      %v352 = vrot.slane %v345, %v351
      %v354 = vadd.f32 %v35, %v352
      %v355 = vadd.f32 %v354, %v255
      %v358 = vunpack.c.l.s4 1983009808
      %v359 = vunpack.c.0.s8 %v358
      %v360 = vlaneseq
      %v361 = vshrl.u32 %v360, 7
      %v362 = vsub.s32 %v359, %v361
      %v363 = vrot.slane %v355, %v362
      %v364 = vcombine.high %v363, %v363
      %v367 = vmin.f32 %v224, %v363
      %v368 = vmin.f32 %v228, %v364
      %v371 = vcombine.low %v367, %v368
      %v373 = vunpack.c.l.s4 1983009808
      %v374 = vunpack.c.0.s8 %v373
      %v375 = vlaneseq
      %v376 = vshrl.u32 %v375, 7
      %v377 = vsub.s32 %v374, %v376
      %v378 = vrot.slane %v371, %v377
      %v380 = vsub.f32 %v355, %v378
      %v383 = vunpack.c.l.s4 1983009808
      %v384 = vunpack.c.0.s8 %v383
      %v385 = vlaneseq
      %v386 = vshrl.u32 %v385, 7
      %v387 = vsub.s32 %v384, %v386
      %v388 = vrot.slane %v380, %v387
      %v389 = vcombine.high %v388, %v388
      %v392 = vsub.f32 %v367, %v388
      %v393 = vsub.f32 %v368, %v389
      %v395 = vsel %vm132, %v393, 0
      %397 = vmatprep.subr.mxu0 %v38
      %398 = vmatpush1.msra.mxu0 %v37
      %399 = vmatprep.subr.mxu0 %v40
      %400 = vmatpush1.msra.mxu0 %v39
      %401 = vmatprep.subr.mxu0 %v42
      %402 = vmatpush1.msra.mxu0 %v41
      %403 = vmatprep.subr.mxu0 %v44
      %404 = vmatpush1.msra.mxu0 %v43
      %405 = vmatprep.subr.mxu0 %v46
      %406 = vmatpush1.msra.mxu0 %v45
      %407 = vmatprep.subr.mxu0 %v48
      %408 = vmatpush1.msra.mxu0 %v47
      %409 = vmatprep.subr.mxu0 %v50
      %410 = vmatpush1.msra.mxu0 %v49
      %411 = vmatprep.subr.mxu0 %v52
      %412 = vmatpush1.msra.mxu0 %v51
      %413 = vmatprep.subr.mxu0 %v54
      %414 = vmatpush1.msra.mxu0 %v53
      %415 = vmatprep.subr.mxu0 %v56
      %416 = vmatpush1.msra.mxu0 %v55
      %417 = vmatprep.subr.mxu0 %v58
      %418 = vmatpush1.msra.mxu0 %v57
      %419 = vmatprep.subr.mxu0 %v60
      %420 = vmatpush1.msra.mxu0 %v59
      %421 = vmatprep.subr.mxu0 %v62
      %422 = vmatpush1.msra.mxu0 %v61
      %423 = vmatprep.subr.mxu0 %v64
      %424 = vmatpush1.msra.mxu0 %v63
      %425 = vmatprep.subr.mxu0 %v66
      %426 = vmatpush1.msra.mxu0 %v65
      %427 = vmatprep.subr.mxu0 %v68
      %428 = vmatpush1.msra.mxu0 %v67
      %429 = vmatprep.subr.mxu0 %v70
      %430 = vmatpush1.msra.mxu0 %v69
      %431 = vmatprep.subr.mxu0 %v72
      %432 = vmatpush1.msra.mxu0 %v71
      %433 = vmatprep.subr.mxu0 %v74
      %434 = vmatpush1.msra.mxu0 %v73
      %435 = vmatprep.subr.mxu0 %v76
      %436 = vmatpush1.msra.mxu0 %v75
      %437 = vmatprep.subr.mxu0 %v78
      %438 = vmatpush1.msra.mxu0 %v77
      %439 = vmatprep.subr.mxu0 %v80
      %440 = vmatpush1.msra.mxu0 %v79
      %441 = vmatprep.subr.mxu0 %v82
      %442 = vmatpush1.msra.mxu0 %v81
      %443 = vmatprep.subr.mxu0 %v84
      %444 = vmatpush1.msra.mxu0 %v83
      %445 = vmatprep.subr.mxu0 0.0
      %446 = vmatpush1.msra.mxu0 0.0
      %447 = vmatprep.subr.mxu0 0.0
      %448 = vmatpush1.msra.mxu0 0.0
      %449 = vmatprep.subr.mxu0 0.0
      %450 = vmatpush1.msra.mxu0 0.0
      %451 = vmatprep.subr.mxu0 0.0
      %452 = vmatpush1.msra.mxu0 0.0
      %453 = vmatprep.subr.mxu0 0.0
      %454 = vmatpush1.msra.mxu0 0.0
      %455 = vmatprep.subr.mxu0 0.0
      %456 = vmatpush1.msra.mxu0 0.0
      %457 = vmatprep.subr.mxu0 0.0
      %458 = vmatpush1.msra.mxu0 0.0
      %459 = vmatprep.subr.mxu0 0.0
      %460 = vmatpush1.msra.mxu0 0.0
      %461 = vmatprep.mubr.f32.mxu0 %v395
      %462 = vmatmul.mubr.f32.gmra.mrb[0].mxu0 %v392
      %v463 = vpop.f32.mrb[0].mxu0
      %v464 = vadd.f32 0.0, %v463
      %v465 = vpop.f32.mrb[0].mxu0
      %v466 = vadd.f32 0.0, %v465
      %467 = vdwg.mxu0
      %v470 = vcombine.low %v464, %v466
      %v472 = vunpack.c.l.s4 1983009808
      %v473 = vunpack.c.0.s8 %v472
      %v474 = vlaneseq
      %v475 = vshrl.u32 %v474, 7
      %v476 = vsub.s32 %v473, %v475
      %v477 = vrot.slane %v470, %v476
      %v479 = vadd.f32 %v35, %v477
      %v480 = vadd.f32 %v479, %v380
      %v483 = vunpack.c.l.s4 1983009808
      %v484 = vunpack.c.0.s8 %v483
      %v485 = vlaneseq
      %v486 = vshrl.u32 %v485, 7
      %v487 = vsub.s32 %v484, %v486
      %v488 = vrot.slane %v480, %v487
      %v489 = vcombine.high %v488, %v488
      %v492 = vmin.f32 %v224, %v488
      %v493 = vmin.f32 %v228, %v489
      %v496 = vcombine.low %v492, %v493
      %v498 = vunpack.c.l.s4 1983009808
      %v499 = vunpack.c.0.s8 %v498
      %v500 = vlaneseq
      %v501 = vshrl.u32 %v500, 7
      %v502 = vsub.s32 %v499, %v501
      %v503 = vrot.slane %v496, %v502
      %v505 = vsub.f32 %v480, %v503
      %v508 = vunpack.c.l.s4 1983009808
      %v509 = vunpack.c.0.s8 %v508
      %v510 = vlaneseq
      %v511 = vshrl.u32 %v510, 7
      %v512 = vsub.s32 %v509, %v511
      %v513 = vrot.slane %v505, %v512
      %v514 = vcombine.high %v513, %v513
      %v517 = vsub.f32 %v492, %v513
      %v518 = vsub.f32 %v493, %v514
      %v520 = vsel %vm132, %v518, 0
      %522 = vmatprep.subr.mxu0 %v38
      %523 = vmatpush1.msra.mxu0 %v37
      %524 = vmatprep.subr.mxu0 %v40
      %525 = vmatpush1.msra.mxu0 %v39
      %526 = vmatprep.subr.mxu0 %v42
      %527 = vmatpush1.msra.mxu0 %v41
      %528 = vmatprep.subr.mxu0 %v44
      %529 = vmatpush1.msra.mxu0 %v43
      %530 = vmatprep.subr.mxu0 %v46
      %531 = vmatpush1.msra.mxu0 %v45
      %532 = vmatprep.subr.mxu0 %v48
      %533 = vmatpush1.msra.mxu0 %v47
      %534 = vmatprep.subr.mxu0 %v50
      %535 = vmatpush1.msra.mxu0 %v49
      %536 = vmatprep.subr.mxu0 %v52
      %537 = vmatpush1.msra.mxu0 %v51
      %538 = vmatprep.subr.mxu0 %v54
      %539 = vmatpush1.msra.mxu0 %v53
      %540 = vmatprep.subr.mxu0 %v56
      %541 = vmatpush1.msra.mxu0 %v55
      %542 = vmatprep.subr.mxu0 %v58
      %543 = vmatpush1.msra.mxu0 %v57
      %544 = vmatprep.subr.mxu0 %v60
      %545 = vmatpush1.msra.mxu0 %v59
      %546 = vmatprep.subr.mxu0 %v62
      %547 = vmatpush1.msra.mxu0 %v61
      %548 = vmatprep.subr.mxu0 %v64
      %549 = vmatpush1.msra.mxu0 %v63
      %550 = vmatprep.subr.mxu0 %v66
      %551 = vmatpush1.msra.mxu0 %v65
      %552 = vmatprep.subr.mxu0 %v68
      %553 = vmatpush1.msra.mxu0 %v67
      %554 = vmatprep.subr.mxu0 %v70
      %555 = vmatpush1.msra.mxu0 %v69
      %556 = vmatprep.subr.mxu0 %v72
      %557 = vmatpush1.msra.mxu0 %v71
      %558 = vmatprep.subr.mxu0 %v74
      %559 = vmatpush1.msra.mxu0 %v73
      %560 = vmatprep.subr.mxu0 %v76
      %561 = vmatpush1.msra.mxu0 %v75
      %562 = vmatprep.subr.mxu0 %v78
      %563 = vmatpush1.msra.mxu0 %v77
      %564 = vmatprep.subr.mxu0 %v80
      %565 = vmatpush1.msra.mxu0 %v79
      %566 = vmatprep.subr.mxu0 %v82
      %567 = vmatpush1.msra.mxu0 %v81
      %568 = vmatprep.subr.mxu0 %v84
      %569 = vmatpush1.msra.mxu0 %v83
      %570 = vmatprep.subr.mxu0 0.0
      %571 = vmatpush1.msra.mxu0 0.0
      %572 = vmatprep.subr.mxu0 0.0
      %573 = vmatpush1.msra.mxu0 0.0
      %574 = vmatprep.subr.mxu0 0.0
      %575 = vmatpush1.msra.mxu0 0.0
      %576 = vmatprep.subr.mxu0 0.0
      %577 = vmatpush1.msra.mxu0 0.0
      %578 = vmatprep.subr.mxu0 0.0
      %579 = vmatpush1.msra.mxu0 0.0
      %580 = vmatprep.subr.mxu0 0.0
      %581 = vmatpush1.msra.mxu0 0.0
      %582 = vmatprep.subr.mxu0 0.0
      %583 = vmatpush1.msra.mxu0 0.0
      %584 = vmatprep.subr.mxu0 0.0
      %585 = vmatpush1.msra.mxu0 0.0
      %586 = vmatprep.mubr.f32.mxu0 %v520
      %587 = vmatmul.mubr.f32.gmra.mrb[0].mxu0 %v517
      %v588 = vpop.f32.mrb[0].mxu0
      %v589 = vadd.f32 0.0, %v588
      %v590 = vpop.f32.mrb[0].mxu0
      %v591 = vadd.f32 0.0, %v590
      %592 = vdwg.mxu0
      %v595 = vcombine.low %v589, %v591
      %v597 = vunpack.c.l.s4 1983009808
      %v598 = vunpack.c.0.s8 %v597
      %v599 = vlaneseq
      %v600 = vshrl.u32 %v599, 7
      %v601 = vsub.s32 %v598, %v600
      %v602 = vrot.slane %v595, %v601
      %v604 = vadd.f32 %v35, %v602
      %v605 = vadd.f32 %v604, %v505
      %v608 = vunpack.c.l.s4 1983009808
      %v609 = vunpack.c.0.s8 %v608
      %v610 = vlaneseq
      %v611 = vshrl.u32 %v610, 7
      %v612 = vsub.s32 %v609, %v611
      %v613 = vrot.slane %v605, %v612
      %v614 = vcombine.high %v613, %v613
      %v617 = vmin.f32 %v224, %v613
      %v618 = vmin.f32 %v228, %v614
      %v621 = vcombine.low %v617, %v618
      %v623 = vunpack.c.l.s4 1983009808
      %v624 = vunpack.c.0.s8 %v623
      %v625 = vlaneseq
      %v626 = vshrl.u32 %v625, 7
      %v627 = vsub.s32 %v624, %v626
      %v628 = vrot.slane %v621, %v627
      %v630 = vsub.f32 %v605, %v628
      %v633 = vunpack.c.l.s4 1983009808
      %v634 = vunpack.c.0.s8 %v633
      %v635 = vlaneseq
      %v636 = vshrl.u32 %v635, 7
      %v637 = vsub.s32 %v634, %v636
      %v638 = vrot.slane %v630, %v637
      %v639 = vcombine.high %v638, %v638
      %v642 = vsub.f32 %v617, %v638
      %v643 = vsub.f32 %v618, %v639
      %v645 = vsel %vm132, %v643, 0
      %647 = vmatprep.subr.mxu0 %v38
      %648 = vmatpush1.msra.mxu0 %v37
      %649 = vmatprep.subr.mxu0 %v40
      %650 = vmatpush1.msra.mxu0 %v39
      %651 = vmatprep.subr.mxu0 %v42
      %652 = vmatpush1.msra.mxu0 %v41
      %653 = vmatprep.subr.mxu0 %v44
      %654 = vmatpush1.msra.mxu0 %v43
      %655 = vmatprep.subr.mxu0 %v46
      %656 = vmatpush1.msra.mxu0 %v45
      %657 = vmatprep.subr.mxu0 %v48
      %658 = vmatpush1.msra.mxu0 %v47
      %659 = vmatprep.subr.mxu0 %v50
      %660 = vmatpush1.msra.mxu0 %v49
      %661 = vmatprep.subr.mxu0 %v52
      %662 = vmatpush1.msra.mxu0 %v51
      %663 = vmatprep.subr.mxu0 %v54
      %664 = vmatpush1.msra.mxu0 %v53
      %665 = vmatprep.subr.mxu0 %v56
      %666 = vmatpush1.msra.mxu0 %v55
      %667 = vmatprep.subr.mxu0 %v58
      %668 = vmatpush1.msra.mxu0 %v57
      %669 = vmatprep.subr.mxu0 %v60
      %670 = vmatpush1.msra.mxu0 %v59
      %671 = vmatprep.subr.mxu0 %v62
      %672 = vmatpush1.msra.mxu0 %v61
      %673 = vmatprep.subr.mxu0 %v64
      %674 = vmatpush1.msra.mxu0 %v63
      %675 = vmatprep.subr.mxu0 %v66
      %676 = vmatpush1.msra.mxu0 %v65
      %677 = vmatprep.subr.mxu0 %v68
      %678 = vmatpush1.msra.mxu0 %v67
      %679 = vmatprep.subr.mxu0 %v70
      %680 = vmatpush1.msra.mxu0 %v69
      %681 = vmatprep.subr.mxu0 %v72
      %682 = vmatpush1.msra.mxu0 %v71
      %683 = vmatprep.subr.mxu0 %v74
      %684 = vmatpush1.msra.mxu0 %v73
      %685 = vmatprep.subr.mxu0 %v76
      %686 = vmatpush1.msra.mxu0 %v75
      %687 = vmatprep.subr.mxu0 %v78
      %688 = vmatpush1.msra.mxu0 %v77
      %689 = vmatprep.subr.mxu0 %v80
      %690 = vmatpush1.msra.mxu0 %v79
      %691 = vmatprep.subr.mxu0 %v82
      %692 = vmatpush1.msra.mxu0 %v81
      %693 = vmatprep.subr.mxu0 %v84
      %694 = vmatpush1.msra.mxu0 %v83
      %695 = vmatprep.subr.mxu0 0.0
      %696 = vmatpush1.msra.mxu0 0.0
      %697 = vmatprep.subr.mxu0 0.0
      %698 = vmatpush1.msra.mxu0 0.0
      %699 = vmatprep.subr.mxu0 0.0
      %700 = vmatpush1.msra.mxu0 0.0
      %701 = vmatprep.subr.mxu0 0.0
      %702 = vmatpush1.msra.mxu0 0.0
      %703 = vmatprep.subr.mxu0 0.0
      %704 = vmatpush1.msra.mxu0 0.0
      %705 = vmatprep.subr.mxu0 0.0
      %706 = vmatpush1.msra.mxu0 0.0
      %707 = vmatprep.subr.mxu0 0.0
      %708 = vmatpush1.msra.mxu0 0.0
      %709 = vmatprep.subr.mxu0 0.0
      %710 = vmatpush1.msra.mxu0 0.0
      %711 = vmatprep.mubr.f32.mxu0 %v645
      %712 = vmatmul.mubr.f32.gmra.mrb[0].mxu0 %v642
      %v713 = vpop.f32.mrb[0].mxu0
      %v714 = vadd.f32 0.0, %v713
      %v715 = vpop.f32.mrb[0].mxu0
      %v716 = vadd.f32 0.0, %v715
      %717 = vdwg.mxu0
      %v720 = vcombine.low %v714, %v716
      %v722 = vunpack.c.l.s4 1983009808
      %v723 = vunpack.c.0.s8 %v722
      %v724 = vlaneseq
      %v725 = vshrl.u32 %v724, 7
      %v726 = vsub.s32 %v723, %v725
      %v727 = vrot.slane %v720, %v726
      %v729 = vadd.f32 %v35, %v727
      %v730 = vadd.f32 %v729, %v630
      %v733 = vunpack.c.l.s4 1983009808
      %v734 = vunpack.c.0.s8 %v733
      %v735 = vlaneseq
      %v736 = vshrl.u32 %v735, 7
      %v737 = vsub.s32 %v734, %v736
      %v738 = vrot.slane %v730, %v737
      %v739 = vcombine.high %v738, %v738
      %v742 = vmin.f32 %v224, %v738
      %v743 = vmin.f32 %v228, %v739
      %v746 = vcombine.low %v742, %v743
      %v748 = vunpack.c.l.s4 1983009808
      %v749 = vunpack.c.0.s8 %v748
      %v750 = vlaneseq
      %v751 = vshrl.u32 %v750, 7
      %v752 = vsub.s32 %v749, %v751
      %v753 = vrot.slane %v746, %v752
      %v755 = vsub.f32 %v730, %v753
      %v758 = vunpack.c.l.s4 1983009808
      %v759 = vunpack.c.0.s8 %v758
      %v760 = vlaneseq
      %v761 = vshrl.u32 %v760, 7
      %v762 = vsub.s32 %v759, %v761
      %v763 = vrot.slane %v755, %v762
      %v764 = vcombine.high %v763, %v763
      %v767 = vsub.f32 %v742, %v763
      %v768 = vsub.f32 %v743, %v764
      %v770 = vsel %vm132, %v768, 0
      %772 = vmatprep.subr.mxu0 %v38
      %773 = vmatpush1.msra.mxu0 %v37
      %774 = vmatprep.subr.mxu0 %v40
      %775 = vmatpush1.msra.mxu0 %v39
      %776 = vmatprep.subr.mxu0 %v42
      %777 = vmatpush1.msra.mxu0 %v41
      %778 = vmatprep.subr.mxu0 %v44
      %779 = vmatpush1.msra.mxu0 %v43
      %780 = vmatprep.subr.mxu0 %v46
      %781 = vmatpush1.msra.mxu0 %v45
      %782 = vmatprep.subr.mxu0 %v48
      %783 = vmatpush1.msra.mxu0 %v47
      %784 = vmatprep.subr.mxu0 %v50
      %785 = vmatpush1.msra.mxu0 %v49
      %786 = vmatprep.subr.mxu0 %v52
      %787 = vmatpush1.msra.mxu0 %v51
      %788 = vmatprep.subr.mxu0 %v54
      %789 = vmatpush1.msra.mxu0 %v53
      %790 = vmatprep.subr.mxu0 %v56
      %791 = vmatpush1.msra.mxu0 %v55
      %792 = vmatprep.subr.mxu0 %v58
      %793 = vmatpush1.msra.mxu0 %v57
      %794 = vmatprep.subr.mxu0 %v60
      %795 = vmatpush1.msra.mxu0 %v59
      %796 = vmatprep.subr.mxu0 %v62
      %797 = vmatpush1.msra.mxu0 %v61
      %798 = vmatprep.subr.mxu0 %v64
      %799 = vmatpush1.msra.mxu0 %v63
      %800 = vmatprep.subr.mxu0 %v66
      %801 = vmatpush1.msra.mxu0 %v65
      %802 = vmatprep.subr.mxu0 %v68
      %803 = vmatpush1.msra.mxu0 %v67
      %804 = vmatprep.subr.mxu0 %v70
      %805 = vmatpush1.msra.mxu0 %v69
      %806 = vmatprep.subr.mxu0 %v72
      %807 = vmatpush1.msra.mxu0 %v71
      %808 = vmatprep.subr.mxu0 %v74
      %809 = vmatpush1.msra.mxu0 %v73
      %810 = vmatprep.subr.mxu0 %v76
      %811 = vmatpush1.msra.mxu0 %v75
      %812 = vmatprep.subr.mxu0 %v78
      %813 = vmatpush1.msra.mxu0 %v77
      %814 = vmatprep.subr.mxu0 %v80
      %815 = vmatpush1.msra.mxu0 %v79
      %816 = vmatprep.subr.mxu0 %v82
      %817 = vmatpush1.msra.mxu0 %v81
      %818 = vmatprep.subr.mxu0 %v84
      %819 = vmatpush1.msra.mxu0 %v83
      %820 = vmatprep.subr.mxu0 0.0
      %821 = vmatpush1.msra.mxu0 0.0
      %822 = vmatprep.subr.mxu0 0.0
      %823 = vmatpush1.msra.mxu0 0.0
      %824 = vmatprep.subr.mxu0 0.0
      %825 = vmatpush1.msra.mxu0 0.0
      %826 = vmatprep.subr.mxu0 0.0
      %827 = vmatpush1.msra.mxu0 0.0
      %828 = vmatprep.subr.mxu0 0.0
      %829 = vmatpush1.msra.mxu0 0.0
      %830 = vmatprep.subr.mxu0 0.0
      %831 = vmatpush1.msra.mxu0 0.0
      %832 = vmatprep.subr.mxu0 0.0
      %833 = vmatpush1.msra.mxu0 0.0
      %834 = vmatprep.subr.mxu0 0.0
      %835 = vmatpush1.msra.mxu0 0.0
      %836 = vmatprep.mubr.f32.mxu0 %v770
      %837 = vmatmul.mubr.f32.gmra.mrb[0].mxu0 %v767
      %v838 = vpop.f32.mrb[0].mxu0
      %v839 = vadd.f32 0.0, %v838
      %v840 = vpop.f32.mrb[0].mxu0
      %v841 = vadd.f32 0.0, %v840
      %842 = vdwg.mxu0
      %v845 = vcombine.low %v839, %v841
      %v847 = vunpack.c.l.s4 1983009808
      %v848 = vunpack.c.0.s8 %v847
      %v849 = vlaneseq
      %v850 = vshrl.u32 %v849, 7
      %v851 = vsub.s32 %v848, %v850
      %v852 = vrot.slane %v845, %v851
      %v854 = vadd.f32 %v35, %v852
      %v855 = vadd.f32 %v854, %v755
      %v858 = vunpack.c.l.s4 1983009808
      %v859 = vunpack.c.0.s8 %v858
      %v860 = vlaneseq
      %v861 = vshrl.u32 %v860, 7
      %v862 = vsub.s32 %v859, %v861
      %v863 = vrot.slane %v855, %v862
      %v864 = vcombine.high %v863, %v863
      %v867 = vmin.f32 %v224, %v863
      %v868 = vmin.f32 %v228, %v864
      %v871 = vcombine.low %v867, %v868
      %v873 = vunpack.c.l.s4 1983009808
      %v874 = vunpack.c.0.s8 %v873
      %v875 = vlaneseq
      %v876 = vshrl.u32 %v875, 7
      %v877 = vsub.s32 %v874, %v876
      %v878 = vrot.slane %v871, %v877
      %v880 = vsub.f32 %v855, %v878
      %v883 = vunpack.c.l.s4 1983009808
      %v884 = vunpack.c.0.s8 %v883
      %v885 = vlaneseq
      %v886 = vshrl.u32 %v885, 7
      %v887 = vsub.s32 %v884, %v886
      %v888 = vrot.slane %v880, %v887
      %v889 = vcombine.high %v888, %v888
      %v892 = vsub.f32 %v867, %v888
      %v893 = vsub.f32 %v868, %v889
      %v895 = vsel %vm132, %v893, 0
      %897 = vmatprep.subr.mxu0 %v38
      %898 = vmatpush1.msra.mxu0 %v37
      %899 = vmatprep.subr.mxu0 %v40
      %900 = vmatpush1.msra.mxu0 %v39
      %901 = vmatprep.subr.mxu0 %v42
      %902 = vmatpush1.msra.mxu0 %v41
      %903 = vmatprep.subr.mxu0 %v44
      %904 = vmatpush1.msra.mxu0 %v43
      %905 = vmatprep.subr.mxu0 %v46
      %906 = vmatpush1.msra.mxu0 %v45
      %907 = vmatprep.subr.mxu0 %v48
      %908 = vmatpush1.msra.mxu0 %v47
      %909 = vmatprep.subr.mxu0 %v50
      %910 = vmatpush1.msra.mxu0 %v49
      %911 = vmatprep.subr.mxu0 %v52
      %912 = vmatpush1.msra.mxu0 %v51
      %913 = vmatprep.subr.mxu0 %v54
      %914 = vmatpush1.msra.mxu0 %v53
      %915 = vmatprep.subr.mxu0 %v56
      %916 = vmatpush1.msra.mxu0 %v55
      %917 = vmatprep.subr.mxu0 %v58
      %918 = vmatpush1.msra.mxu0 %v57
      %919 = vmatprep.subr.mxu0 %v60
      %920 = vmatpush1.msra.mxu0 %v59
      %921 = vmatprep.subr.mxu0 %v62
      %922 = vmatpush1.msra.mxu0 %v61
      %923 = vmatprep.subr.mxu0 %v64
      %924 = vmatpush1.msra.mxu0 %v63
      %925 = vmatprep.subr.mxu0 %v66
      %926 = vmatpush1.msra.mxu0 %v65
      %927 = vmatprep.subr.mxu0 %v68
      %928 = vmatpush1.msra.mxu0 %v67
      %929 = vmatprep.subr.mxu0 %v70
      %930 = vmatpush1.msra.mxu0 %v69
      %931 = vmatprep.subr.mxu0 %v72
      %932 = vmatpush1.msra.mxu0 %v71
      %933 = vmatprep.subr.mxu0 %v74
      %934 = vmatpush1.msra.mxu0 %v73
      %935 = vmatprep.subr.mxu0 %v76
      %936 = vmatpush1.msra.mxu0 %v75
      %937 = vmatprep.subr.mxu0 %v78
      %938 = vmatpush1.msra.mxu0 %v77
      %939 = vmatprep.subr.mxu0 %v80
      %940 = vmatpush1.msra.mxu0 %v79
      %941 = vmatprep.subr.mxu0 %v82
      %942 = vmatpush1.msra.mxu0 %v81
      %943 = vmatprep.subr.mxu0 %v84
      %944 = vmatpush1.msra.mxu0 %v83
      %945 = vmatprep.subr.mxu0 0.0
      %946 = vmatpush1.msra.mxu0 0.0
      %947 = vmatprep.subr.mxu0 0.0
      %948 = vmatpush1.msra.mxu0 0.0
      %949 = vmatprep.subr.mxu0 0.0
      %950 = vmatpush1.msra.mxu0 0.0
      %951 = vmatprep.subr.mxu0 0.0
      %952 = vmatpush1.msra.mxu0 0.0
      %953 = vmatprep.subr.mxu0 0.0
      %954 = vmatpush1.msra.mxu0 0.0
      %955 = vmatprep.subr.mxu0 0.0
      %956 = vmatpush1.msra.mxu0 0.0
      %957 = vmatprep.subr.mxu0 0.0
      %958 = vmatpush1.msra.mxu0 0.0
      %959 = vmatprep.subr.mxu0 0.0
      %960 = vmatpush1.msra.mxu0 0.0
      %961 = vmatprep.mubr.f32.mxu0 %v895
      %962 = vmatmul.mubr.f32.gmra.mrb[0].mxu0 %v892
      %v963 = vpop.f32.mrb[0].mxu0
      %v964 = vadd.f32 0.0, %v963
      %v965 = vpop.f32.mrb[0].mxu0
      %v966 = vadd.f32 0.0, %v965
      %967 = vdwg.mxu0
      %v970 = vcombine.low %v964, %v966
      %v972 = vunpack.c.l.s4 1983009808
      %v973 = vunpack.c.0.s8 %v972
      %v974 = vlaneseq
      %v975 = vshrl.u32 %v974, 7
      %v976 = vsub.s32 %v973, %v975
      %v977 = vrot.slane %v970, %v976
      %v979 = vadd.f32 %v35, %v977
      %v980 = vadd.f32 %v979, %v880
      %v983 = vunpack.c.l.s4 1983009808
      %v984 = vunpack.c.0.s8 %v983
      %v985 = vlaneseq
      %v986 = vshrl.u32 %v985, 7
      %v987 = vsub.s32 %v984, %v986
      %v988 = vrot.slane %v980, %v987
      %v989 = vcombine.high %v988, %v988
      %v992 = vmin.f32 %v224, %v988
      %v993 = vmin.f32 %v228, %v989
      %v996 = vcombine.low %v992, %v993
      %v998 = vunpack.c.l.s4 1983009808
      %v999 = vunpack.c.0.s8 %v998
      %v1000 = vlaneseq
      %v1001 = vshrl.u32 %v1000, 7
      %v1002 = vsub.s32 %v999, %v1001
      %v1003 = vrot.slane %v996, %v1002
      %v1005 = vsub.f32 %v980, %v1003
      %v1008 = vunpack.c.l.s4 1983009808
      %v1009 = vunpack.c.0.s8 %v1008
      %v1010 = vlaneseq
      %v1011 = vshrl.u32 %v1010, 7
      %v1012 = vsub.s32 %v1009, %v1011
      %v1013 = vrot.slane %v1005, %v1012
      %v1014 = vcombine.high %v1013, %v1013
      %v1017 = vsub.f32 %v992, %v1013
      %v1018 = vsub.f32 %v993, %v1014
      %v1020 = vsel %vm132, %v1018, 0
      %1022 = vmatprep.subr.mxu0 %v38
      %1023 = vmatpush1.msra.mxu0 %v37
      %1024 = vmatprep.subr.mxu0 %v40
      %1025 = vmatpush1.msra.mxu0 %v39
      %1026 = vmatprep.subr.mxu0 %v42
      %1027 = vmatpush1.msra.mxu0 %v41
      %1028 = vmatprep.subr.mxu0 %v44
      %1029 = vmatpush1.msra.mxu0 %v43
      %1030 = vmatprep.subr.mxu0 %v46
      %1031 = vmatpush1.msra.mxu0 %v45
      %1032 = vmatprep.subr.mxu0 %v48
      %1033 = vmatpush1.msra.mxu0 %v47
      %1034 = vmatprep.subr.mxu0 %v50
      %1035 = vmatpush1.msra.mxu0 %v49
      %1036 = vmatprep.subr.mxu0 %v52
      %1037 = vmatpush1.msra.mxu0 %v51
      %1038 = vmatprep.subr.mxu0 %v54
      %1039 = vmatpush1.msra.mxu0 %v53
      %1040 = vmatprep.subr.mxu0 %v56
      %1041 = vmatpush1.msra.mxu0 %v55
      %1042 = vmatprep.subr.mxu0 %v58
      %1043 = vmatpush1.msra.mxu0 %v57
      %1044 = vmatprep.subr.mxu0 %v60
      %1045 = vmatpush1.msra.mxu0 %v59
      %1046 = vmatprep.subr.mxu0 %v62
      %1047 = vmatpush1.msra.mxu0 %v61
      %1048 = vmatprep.subr.mxu0 %v64
      %1049 = vmatpush1.msra.mxu0 %v63
      %1050 = vmatprep.subr.mxu0 %v66
      %1051 = vmatpush1.msra.mxu0 %v65
      %1052 = vmatprep.subr.mxu0 %v68
      %1053 = vmatpush1.msra.mxu0 %v67
      %1054 = vmatprep.subr.mxu0 %v70
      %1055 = vmatpush1.msra.mxu0 %v69
      %1056 = vmatprep.subr.mxu0 %v72
      %1057 = vmatpush1.msra.mxu0 %v71
      %1058 = vmatprep.subr.mxu0 %v74
      %1059 = vmatpush1.msra.mxu0 %v73
      %1060 = vmatprep.subr.mxu0 %v76
      %1061 = vmatpush1.msra.mxu0 %v75
      %1062 = vmatprep.subr.mxu0 %v78
      %1063 = vmatpush1.msra.mxu0 %v77
      %1064 = vmatprep.subr.mxu0 %v80
      %1065 = vmatpush1.msra.mxu0 %v79
      %1066 = vmatprep.subr.mxu0 %v82
      %1067 = vmatpush1.msra.mxu0 %v81
      %1068 = vmatprep.subr.mxu0 %v84
      %1069 = vmatpush1.msra.mxu0 %v83
      %1070 = vmatprep.subr.mxu0 0.0
      %1071 = vmatpush1.msra.mxu0 0.0
      %1072 = vmatprep.subr.mxu0 0.0
      %1073 = vmatpush1.msra.mxu0 0.0
      %1074 = vmatprep.subr.mxu0 0.0
      %1075 = vmatpush1.msra.mxu0 0.0
      %1076 = vmatprep.subr.mxu0 0.0
      %1077 = vmatpush1.msra.mxu0 0.0
      %1078 = vmatprep.subr.mxu0 0.0
      %1079 = vmatpush1.msra.mxu0 0.0
      %1080 = vmatprep.subr.mxu0 0.0
      %1081 = vmatpush1.msra.mxu0 0.0
      %1082 = vmatprep.subr.mxu0 0.0
      %1083 = vmatpush1.msra.mxu0 0.0
      %1084 = vmatprep.subr.mxu0 0.0
      %1085 = vmatpush1.msra.mxu0 0.0
      %1086 = vmatprep.mubr.f32.mxu0 %v1020
      %1087 = vmatmul.mubr.f32.gmra.mrb[0].mxu0 %v1017
      %v1088 = vpop.f32.mrb[0].mxu0
      %v1089 = vadd.f32 0.0, %v1088
      %v1090 = vpop.f32.mrb[0].mxu0
      %v1091 = vadd.f32 0.0, %v1090
      %1092 = vdwg.mxu0
      %v1095 = vcombine.low %v1089, %v1091
      %v1097 = vunpack.c.l.s4 1983009808
      %v1098 = vunpack.c.0.s8 %v1097
      %v1099 = vlaneseq
      %v1100 = vshrl.u32 %v1099, 7
      %v1101 = vsub.s32 %v1098, %v1100
      %v1102 = vrot.slane %v1095, %v1101
      %v1104 = vadd.f32 %v35, %v1102
      %v1105 = vadd.f32 %v1104, %v1005
      %v1108 = vunpack.c.l.s4 1983009808
      %v1109 = vunpack.c.0.s8 %v1108
      %v1110 = vlaneseq
      %v1111 = vshrl.u32 %v1110, 7
      %v1112 = vsub.s32 %v1109, %v1111
      %v1113 = vrot.slane %v1105, %v1112
      %v1114 = vcombine.high %v1113, %v1113
      %v1117 = vmin.f32 %v224, %v1113
      %v1118 = vmin.f32 %v228, %v1114
      %v1121 = vcombine.low %v1117, %v1118
      %v1123 = vunpack.c.l.s4 1983009808
      %v1124 = vunpack.c.0.s8 %v1123
      %v1125 = vlaneseq
      %v1126 = vshrl.u32 %v1125, 7
      %v1127 = vsub.s32 %v1124, %v1126
      %v1128 = vrot.slane %v1121, %v1127
      %v1130 = vsub.f32 %v1105, %v1128
    $region30: #{tpu_custom_call.1} parent=1 // loop_footer
      %s115 = sadd.s32 1, %s111
    $region31: #{tpu_custom_call.1} parent=1 // loop_footer_branch
      %110 = sbr.rel target = $region27
    $region32: #{tpu_custom_call.1} parent=1 // loop_exit
      _
    %v1133 = vunpack.c.l.s4 1983009808
    %v1134 = vunpack.c.0.s8 %v1133
    %v1135 = vlaneseq
    %v1136 = vshrl.u32 %v1135, 7
    %v1137 = vsub.s32 %v1134, %v1136
    %v1138 = vrot.slane %v118, %v1137
    %v1139 = vcombine.high %v1138, %v1138
    %v1142 = vsub.f32 %v116, %v1138
    %v1143 = vsub.f32 %v117, %v1139
    %vm1144 = vcmask 523264
    %v1146 = vsel %vm1144, %v1143, 0
    %1148 = vmatprep.subr.mxu0 0.0
    %1149 = vmatpush1.msra.mxu0 %v85
    %1150 = vmatprep.subr.mxu0 0.0
    %1151 = vmatpush1.msra.mxu0 %v86
    %1152 = vmatprep.subr.mxu0 0.0
    %1153 = vmatpush1.msra.mxu0 %v87
    %1154 = vmatprep.subr.mxu0 0.0
    %1155 = vmatpush1.msra.mxu0 %v88
    %1156 = vmatprep.subr.mxu0 0.0
    %1157 = vmatpush1.msra.mxu0 %v89
    %1158 = vmatprep.subr.mxu0 0.0
    %1159 = vmatpush1.msra.mxu0 %v90
    %1160 = vmatprep.subr.mxu0 0.0
    %1161 = vmatpush1.msra.mxu0 %v91
    %1162 = vmatprep.subr.mxu0 0.0
    %1163 = vmatpush1.msra.mxu0 %v92
    %1164 = vmatprep.subr.mxu0 0.0
    %1165 = vmatpush1.msra.mxu0 %v93
    %1166 = vmatprep.subr.mxu0 0.0
    %1167 = vmatpush1.msra.mxu0 %v94
    %1168 = vmatprep.subr.mxu0 0.0
    %1169 = vmatpush1.msra.mxu0 %v95
    %1170 = vmatprep.subr.mxu0 0.0
    %1171 = vmatpush1.msra.mxu0 %v96
    %1172 = vmatprep.subr.mxu0 0.0
    %1173 = vmatpush1.msra.mxu0 %v97
    %1174 = vmatprep.subr.mxu0 0.0
    %1175 = vmatpush1.msra.mxu0 %v98
    %1176 = vmatprep.subr.mxu0 0.0
    %1177 = vmatpush1.msra.mxu0 %v99
    %1178 = vmatprep.subr.mxu0 0.0
    %1179 = vmatpush1.msra.mxu0 %v100
    %1180 = vmatprep.subr.mxu0 0.0
    %1181 = vmatpush1.msra.mxu0 %v101
    %1182 = vmatprep.subr.mxu0 0.0
    %1183 = vmatpush1.msra.mxu0 %v102
    %1184 = vmatprep.subr.mxu0 0.0
    %1185 = vmatpush1.msra.mxu0 %v103
    %1186 = vmatprep.subr.mxu0 0.0
    %1187 = vmatpush1.msra.mxu0 %v104
    %1188 = vmatprep.subr.mxu0 0.0
    %1189 = vmatpush1.msra.mxu0 %v105
    %1190 = vmatprep.subr.mxu0 0.0
    %1191 = vmatpush1.msra.mxu0 %v106
    %1192 = vmatprep.subr.mxu0 0.0
    %1193 = vmatpush1.msra.mxu0 %v107
    %1194 = vmatprep.subr.mxu0 0.0
    %1195 = vmatpush1.msra.mxu0 %v108
    %1196 = vmatprep.subr.mxu0 0.0
    %1197 = vmatpush1.msra.mxu0 0.0
    %1198 = vmatprep.subr.mxu0 0.0
    %1199 = vmatpush1.msra.mxu0 0.0
    %1200 = vmatprep.subr.mxu0 0.0
    %1201 = vmatpush1.msra.mxu0 0.0
    %1202 = vmatprep.subr.mxu0 0.0
    %1203 = vmatpush1.msra.mxu0 0.0
    %1204 = vmatprep.subr.mxu0 0.0
    %1205 = vmatpush1.msra.mxu0 0.0
    %1206 = vmatprep.subr.mxu0 0.0
    %1207 = vmatpush1.msra.mxu0 0.0
    %1208 = vmatprep.subr.mxu0 0.0
    %1209 = vmatpush1.msra.mxu0 0.0
    %1210 = vmatprep.subr.mxu0 0.0
    %1211 = vmatpush1.msra.mxu0 0.0
    %1212 = vmatprep.mubr.f32.mxu0 %v1146
    %1213 = vmatmul.mubr.f32.gmra.mrb[0].mxu0 %v1142
    %v1214 = vpop.f32.mrb[0].mxu0
    %v1215 = vadd.f32 0.0, %v1214
    %v1216 = vpop.f32.mrb[0].mxu0
    %1217 = vdwg.mxu0
    %v1218 = vadd.f32 %v36, %v1215
    %vm1219 = vcmask 517120
    %1220 = vst.msk [vmem:[#allocation5] sm:$0x3] %vm1219, %v1218
    // Predicated region
    $region33: #{tpu_custom_call.1} parent=1 // pred_check
      _
    $region34: #{tpu_custom_call.1} parent=1 // pred_check_branch
      %1222 = sbr.rel (0) target = $region36
    $region35: #{tpu_custom_call.1} parent=1 // pred_region
      %s1224 = ssub.s32 32, 32
      %1225 = vsyncadd [#allocation4], %s1224
      %s1227 = sshll.u32 [#allocation5], 4
      %s1228 = int_to_ptr.vmem [resolvable:$true] %s1227
      %1230 = dma.vmem_to_hbm [thread:$0]  %s1228, 32, %s5, [#allocation4]
    $region36: #{tpu_custom_call.1} parent=1 // pred_fallthru
      _
    // Predicated region
    $region37: #{tpu_custom_call.1} parent=1 // pred_check
      _
    $region38: #{tpu_custom_call.1} parent=1 // pred_check_branch
      %1232 = sbr.rel (0) target = $region40
    $region39: #{tpu_custom_call.1} parent=1 // pred_region
      %1233 = dma.done [#allocation4], 32
    $region40: #{tpu_custom_call.1} parent=1 // pred_fallthru
      _
    %1234 = vsyncpa [#allocation3], 1
    %1235 = vsyncpa [#allocation4], 1

</llo_original>
